<compile_context>
chip_gen: v7x
topology: tpu7x:2x2x1
jax: 0.10.0
libtpu: 0.0.40
codegen_flags: <defaults>
</compile_context>

<pallas_src>
import functools

import jax
import jax.numpy as jnp
from jax.experimental import pallas as pl
from jax.experimental.pallas import tpu as pltpu

_ISSUE_UNROLL = 8   # rows gathered per scalar-loop step (issue-loop unroll)


def _utterer_embed(utt_ids_ref, utt_tab_ref):
    """3-way VPU select over rows {0, 1, 2(=zeros, padding_idx)} of the utterer table."""
    uids = utt_ids_ref[...]                       # (T, 1) int32
    row0 = utt_tab_ref[0:1, :]                    # (1, D)
    row1 = utt_tab_ref[1:2, :]
    row2 = utt_tab_ref[2:3, :]                    # zero row (padding_idx=2)
    return jnp.where(uids == 0, row0, jnp.where(uids == 1, row1, row2))


def _fuse_store(out_ref, utt_emb):
    # Up-convert for the add (v5e has no bf16 VPU), store in the output dtype.
    fused = out_ref[...].astype(jnp.float32) + utt_emb.astype(jnp.float32)
    out_ref[...] = fused.astype(out_ref.dtype)


def _embed_fuse_hbm_kernel(tok_ids_sref, utt_ids_ref, tok_tab_hbm, utt_tab_ref,
                           out_ref, dma_sem):
    """HBM-resident-table path (real BART vocab).

    tok_ids_sref: (N_pad,) int32  -- all token ids, scalar-prefetched (SMEM)
    utt_ids_ref:  (T, 1)  int32   -- this tile's utterer ids (VMEM)
    tok_tab_hbm:  (V, D)          -- token embedding table, HBM-resident
    utt_tab_ref:  (8, D)          -- padded utterer table (rows 3..7 unused)
    out_ref:      (T, D)          -- fused embeddings for this tile
    dma_sem:      shared DMA semaphore for the per-row gather copies
    """
    T = out_ref.shape[0]
    base = pl.multiple_of(pl.program_id(0) * T, T)

    # Issue all T row gathers (HBM table row -> out_ref row) before any wait,
    # unrolled x8 so SMEM id reads (scalar slot) co-issue with descriptor
    # pushes (misc slot).  All DMAs are in flight while later ones are issued.
    @pl.loop(0, T, step=_ISSUE_UNROLL)
    def _issue(t0):
        for j in range(_ISSUE_UNROLL):
            t = t0 + j
            tid = tok_ids_sref[base + t]
            pltpu.make_async_copy(
                tok_tab_hbm.at[pl.ds(tid, 1), :],
                out_ref.at[pl.ds(t, 1), :],
                dma_sem,
            ).start()

    # Single aggregate wait: the shared DMA semaphore counts bytes, and T rows
    # of D elements equal one (T, D) block, so one descriptor retires them all.
    pltpu.make_async_copy(
        tok_tab_hbm.at[pl.ds(0, T), :],
        out_ref,
        dma_sem,
    ).wait()

    _fuse_store(out_ref, _utterer_embed(utt_ids_ref, utt_tab_ref))


def _embed_fuse_vmem_kernel(tok_ids_sref, utt_ids_ref, tok_tab_ref, utt_tab_ref,
                            out_ref):
    """VMEM-resident-table fast path (small vocab): no DMA descriptors at all."""
    T = out_ref.shape[0]
    base = pl.multiple_of(pl.program_id(0) * T, T)

    @pl.loop(0, T, step=_ISSUE_UNROLL)
    def _gather(t0):
        for j in range(_ISSUE_UNROLL):
            t = t0 + j
            tid = tok_ids_sref[base + t]
            out_ref[pl.ds(t, 1), :] = tok_tab_ref[pl.ds(tid, 1), :]

    _fuse_store(out_ref, _utterer_embed(utt_ids_ref, utt_tab_ref))


@functools.partial(jax.jit,
                   static_argnames=("block_t", "vmem_table_budget_bytes"))
def next_utterance_embeds(input_ids, utterer_ids, tok_table, utt_table, *,
                          block_t=1024, vmem_table_budget_bytes=8 * 1024 * 1024):
    """Equivalent of: embedder(input_ids) + utterer_encoder(utterer_ids).

    input_ids, utterer_ids: [..., S] int (identical shapes).
    tok_table: [V, D], utt_table: [3, D] (row 2 == 0, padding_idx).
    Returns [..., S, D] fused embeddings (what the module feeds to BART).
    """
    if input_ids.shape != utterer_ids.shape:
        raise ValueError("Shape of `utterer_ids` should be same as `input_ids`")
    if block_t % _ISSUE_UNROLL:
        raise ValueError("block_t must be a multiple of 8")

    V, D = tok_table.shape
    itemsize = jnp.dtype(tok_table.dtype).itemsize
    N = input_ids.size
    n_tiles = -(-N // block_t)
    N_pad = n_tiles * block_t

    use_vmem_table = (V * D * itemsize) <= vmem_table_budget_bytes

    # Clamp ids so stray / pad values can never drive the gather out of the
    # tables (torch.nn.Embedding would raise on OOB instead — documented delta).
    tok_flat = jnp.clip(input_ids.reshape(N).astype(jnp.int32), 0, V - 1)
    utt_flat = jnp.clip(utterer_ids.reshape(N).astype(jnp.int32), 0, 2)
    if N_pad != N:
        tok_flat = jnp.pad(tok_flat, (0, N_pad - N))                      # token id 0
        utt_flat = jnp.pad(utt_flat, (0, N_pad - N), constant_values=2)   # padding_idx
    utt_2d = utt_flat.reshape(N_pad, 1)
    # TODO(synk): for very long inputs (>~128K tokens) stage the token ids per
    # tile (HBM->SMEM scratch DMA) instead of one whole-array scalar prefetch;
    # a 1-D SMEM array pads to next_pow2(4*N_pad).

    # Pad the tiny utterer table to 8 rows for clean (8, 128) VMEM tiling.
    U_pad = 8
    utt_tab_padded = (jnp.zeros((U_pad, D), tok_table.dtype)
                      .at[:utt_table.shape[0]]
                      .set(utt_table.astype(tok_table.dtype)))

    # VMEM budget: double-buffered output block + id block + utterer table
    # (+ the whole token table on the fast path).  Never request below 32 MiB.
    vmem_need = (2 * block_t * D * itemsize
                 + 2 * block_t * 128 * 4          # (block_t, 1) ids pad to 128 lanes
                 + 2 * U_pad * D * itemsize)
    if use_vmem_table:
        vmem_need += 2 * V * D * itemsize
    vmem_limit = max(int(2 * vmem_need) + (8 << 20), 32 << 20)

    common = dict(
        num_scalar_prefetch=1,                                     # token ids -> SMEM
        grid=(n_tiles,),
        out_specs=pl.BlockSpec((block_t, D), lambda i, tok_ids: (i, 0)),
    )
    if use_vmem_table:
        kernel = _embed_fuse_vmem_kernel
        grid_spec = pltpu.PrefetchScalarGridSpec(
            in_specs=[
                pl.BlockSpec((block_t, 1), lambda i, tok_ids: (i, 0)),   # utterer ids tile
                pl.BlockSpec((V, D), lambda i, tok_ids: (0, 0)),         # whole table in VMEM
                pl.BlockSpec((U_pad, D), lambda i, tok_ids: (0, 0)),     # tiny utterer table
            ],
            **common,
        )
    else:
        if V < block_t:
            raise ValueError("HBM gather path requires vocab >= block_t "
                             "(aggregate-wait descriptor is (block_t, D)).")
        kernel = _embed_fuse_hbm_kernel
        grid_spec = pltpu.PrefetchScalarGridSpec(
            in_specs=[
                pl.BlockSpec((block_t, 1), lambda i, tok_ids: (i, 0)),   # utterer ids tile
                pl.BlockSpec(memory_space=pl.ANY),                        # token table (HBM)
                pl.BlockSpec((U_pad, D), lambda i, tok_ids: (0, 0)),     # tiny utterer table
            ],
            scratch_shapes=[pltpu.SemaphoreType.DMA(())],                 # shared row-copy sem
            **common,
        )

    out = pl.pallas_call(
        kernel,
        out_shape=jax.ShapeDtypeStruct((N_pad, D), tok_table.dtype),
        grid_spec=grid_spec,
        compiler_params=pltpu.CompilerParams(
            dimension_semantics=("parallel",),      # v7x: shard tiles over both TCs
            vmem_limit_bytes=vmem_limit,
        ),
    )(tok_flat, utt_2d, tok_table, utt_tab_padded)

    return out[:N].reshape(*input_ids.shape, D)


if __name__ == "__main__":
    # Small synthetic shapes consistent with the module's forward.
    B, S = 2, 384          # N = 768 tokens -> 3 tiles at block_t=256
    V, D = 512, 128        # synthetic table (real BART: 50265 x 768)
    U_REAL = 3             # utterer vocab (3, padding_idx=2)

    key = jax.random.PRNGKey(0)
    k_tok, k_utt, k_ids, k_uids = jax.random.split(key, 4)

    # Deterministic parameter init (synthetic; module's __init__ defines shapes).
    tok_table = jax.random.normal(k_tok, (V, D), dtype=jnp.float32) * 0.02
    utt_table = jax.random.normal(k_utt, (U_REAL, D), dtype=jnp.float32) * 0.02
    utt_table = utt_table.at[2].set(0.0)   # nn.Embedding padding_idx=2 -> zero row

    input_ids = jax.random.randint(k_ids, (B, S), 0, V, dtype=jnp.int32)
    utterer_ids = jax.random.randint(k_uids, (B, S), 0, U_REAL, dtype=jnp.int32)

    # Reference: plain JAX gather + add (matches torch embedding lookups).
    ref = tok_table[input_ids] + utt_table[utterer_ids]

    # VMEM fast path (table = 256 KB, fits the per-kernel VMEM budget).
    out_vmem = next_utterance_embeds(input_ids, utterer_ids, tok_table,
                                     utt_table, block_t=256)
    # HBM gather path (what the real 50265x768 BART table takes; forced here).
    out_hbm = next_utterance_embeds(input_ids, utterer_ids, tok_table,
                                    utt_table, block_t=256,
                                    vmem_table_budget_bytes=0)
    out_vmem, out_hbm = jax.block_until_ready((out_vmem, out_hbm))

    assert out_vmem.shape == (B, S, D)
    assert jnp.allclose(out_vmem, ref, atol=1e-6, rtol=1e-6), "VMEM path mismatch"
    assert jnp.allclose(out_hbm, ref, atol=1e-6, rtol=1e-6), "HBM path mismatch"

    print("KERNEL_OK")
</pallas_src>

<mosaic_0001>
module attributes {stable_mosaic.version = 11 : i64} {
  func.func @_embed_fuse_vmem_kernel(%arg0: i32, %arg1: memref<768xi32, #tpu.memory_space<smem>>, %arg2: memref<256x1xi32, #tpu.memory_space<vmem>>, %arg3: memref<512x128xf32, #tpu.memory_space<vmem>>, %arg4: memref<8x128xf32, #tpu.memory_space<vmem>>, %arg5: memref<256x128xf32, #tpu.memory_space<vmem>>) attributes {dimension_semantics = [#tpu.dimension_semantics<parallel>], iteration_bounds = array<i64: 3>, scalar_prefetch = 1 : i64, scratch_operands = 0 : i64, tpu.core_type = #tpu.core_type<tc>, window_params = [{transform_indices = @transform_0, window_bounds = array<i64: 256, 1>}, {pipeline_mode = #tpu.pipeline_mode<synchronous>, transform_indices = @transform_1, window_bounds = array<i64: 512, 128>}, {pipeline_mode = #tpu.pipeline_mode<synchronous>, transform_indices = @transform_2, window_bounds = array<i64: 8, 128>}, {transform_indices = @transform_3, window_bounds = array<i64: 256, 128>}]} {
    %c256_i32 = arith.constant 256 : i32
    %0 = arith.muli %arg0, %c256_i32 : i32
    %1 = tpu.assume_multiple %0, 256 : i32
    %c0_i32 = arith.constant 0 : i32
    %c32_i32 = arith.constant 32 : i32
    %2 = arith.addi %c0_i32, %c32_i32 : i32
    %c1_i32 = arith.constant 1 : i32
    scf.for %arg6 = %c0_i32 to %2 step %c1_i32  : i32 {
      %c8_i32 = arith.constant 8 : i32
      %26 = arith.muli %arg6, %c8_i32 : i32
      %c0_i32_12 = arith.constant 0 : i32
      %27 = arith.addi %c0_i32_12, %26 : i32
      %c0_i32_13 = arith.constant 0 : i32
      %28 = arith.addi %27, %c0_i32_13 : i32
      %29 = arith.addi %1, %28 : i32
      %30 = arith.index_cast %29 : i32 to index
      %31 = memref.load %arg1[%30] : memref<768xi32, #tpu.memory_space<smem>>
      %32 = arith.index_cast %31 : i32 to index
      %c0_14 = arith.constant 0 : index
      %33 = vector.load %arg3[%32, %c0_14] : memref<512x128xf32, #tpu.memory_space<vmem>>, vector<1x128xf32>
      %34 = arith.index_cast %28 : i32 to index
      %c0_15 = arith.constant 0 : index
      %35 = vector.load %arg5[%34, %c0_15] : memref<256x128xf32, #tpu.memory_space<vmem>>, vector<1x128xf32>
      tpu.vector_store %arg5[%34, %c0_15], %33 {strides = array<i32>} : memref<256x128xf32, #tpu.memory_space<vmem>>, vector<1x128xf32>,
      %c1_i32_16 = arith.constant 1 : i32
      %36 = arith.addi %27, %c1_i32_16 : i32
      %37 = arith.addi %1, %36 : i32
      %38 = arith.index_cast %37 : i32 to index
      %39 = memref.load %arg1[%38] : memref<768xi32, #tpu.memory_space<smem>>
      %40 = arith.index_cast %39 : i32 to index
      %c0_17 = arith.constant 0 : index
      %41 = vector.load %arg3[%40, %c0_17] : memref<512x128xf32, #tpu.memory_space<vmem>>, vector<1x128xf32>
      %42 = arith.index_cast %36 : i32 to index
      %c0_18 = arith.constant 0 : index
      %43 = vector.load %arg5[%42, %c0_18] : memref<256x128xf32, #tpu.memory_space<vmem>>, vector<1x128xf32>
      tpu.vector_store %arg5[%42, %c0_18], %41 {strides = array<i32>} : memref<256x128xf32, #tpu.memory_space<vmem>>, vector<1x128xf32>,
      %c2_i32 = arith.constant 2 : i32
      %44 = arith.addi %27, %c2_i32 : i32
      %45 = arith.addi %1, %44 : i32
      %46 = arith.index_cast %45 : i32 to index
      %47 = memref.load %arg1[%46] : memref<768xi32, #tpu.memory_space<smem>>
      %48 = arith.index_cast %47 : i32 to index
      %c0_19 = arith.constant 0 : index
      %49 = vector.load %arg3[%48, %c0_19] : memref<512x128xf32, #tpu.memory_space<vmem>>, vector<1x128xf32>
      %50 = arith.index_cast %44 : i32 to index
      %c0_20 = arith.constant 0 : index
      %51 = vector.load %arg5[%50, %c0_20] : memref<256x128xf32, #tpu.memory_space<vmem>>, vector<1x128xf32>
      tpu.vector_store %arg5[%50, %c0_20], %49 {strides = array<i32>} : memref<256x128xf32, #tpu.memory_space<vmem>>, vector<1x128xf32>,
      %c3_i32 = arith.constant 3 : i32
      %52 = arith.addi %27, %c3_i32 : i32
      %53 = arith.addi %1, %52 : i32
      %54 = arith.index_cast %53 : i32 to index
      %55 = memref.load %arg1[%54] : memref<768xi32, #tpu.memory_space<smem>>
      %56 = arith.index_cast %55 : i32 to index
      %c0_21 = arith.constant 0 : index
      %57 = vector.load %arg3[%56, %c0_21] : memref<512x128xf32, #tpu.memory_space<vmem>>, vector<1x128xf32>
      %58 = arith.index_cast %52 : i32 to index
      %c0_22 = arith.constant 0 : index
      %59 = vector.load %arg5[%58, %c0_22] : memref<256x128xf32, #tpu.memory_space<vmem>>, vector<1x128xf32>
      tpu.vector_store %arg5[%58, %c0_22], %57 {strides = array<i32>} : memref<256x128xf32, #tpu.memory_space<vmem>>, vector<1x128xf32>,
      %c4_i32 = arith.constant 4 : i32
      %60 = arith.addi %27, %c4_i32 : i32
      %61 = arith.addi %1, %60 : i32
      %62 = arith.index_cast %61 : i32 to index
      %63 = memref.load %arg1[%62] : memref<768xi32, #tpu.memory_space<smem>>
      %64 = arith.index_cast %63 : i32 to index
      %c0_23 = arith.constant 0 : index
      %65 = vector.load %arg3[%64, %c0_23] : memref<512x128xf32, #tpu.memory_space<vmem>>, vector<1x128xf32>
      %66 = arith.index_cast %60 : i32 to index
      %c0_24 = arith.constant 0 : index
      %67 = vector.load %arg5[%66, %c0_24] : memref<256x128xf32, #tpu.memory_space<vmem>>, vector<1x128xf32>
      tpu.vector_store %arg5[%66, %c0_24], %65 {strides = array<i32>} : memref<256x128xf32, #tpu.memory_space<vmem>>, vector<1x128xf32>,
      %c5_i32 = arith.constant 5 : i32
      %68 = arith.addi %27, %c5_i32 : i32
      %69 = arith.addi %1, %68 : i32
      %70 = arith.index_cast %69 : i32 to index
      %71 = memref.load %arg1[%70] : memref<768xi32, #tpu.memory_space<smem>>
      %72 = arith.index_cast %71 : i32 to index
      %c0_25 = arith.constant 0 : index
      %73 = vector.load %arg3[%72, %c0_25] : memref<512x128xf32, #tpu.memory_space<vmem>>, vector<1x128xf32>
      %74 = arith.index_cast %68 : i32 to index
      %c0_26 = arith.constant 0 : index
      %75 = vector.load %arg5[%74, %c0_26] : memref<256x128xf32, #tpu.memory_space<vmem>>, vector<1x128xf32>
      tpu.vector_store %arg5[%74, %c0_26], %73 {strides = array<i32>} : memref<256x128xf32, #tpu.memory_space<vmem>>, vector<1x128xf32>,
      %c6_i32 = arith.constant 6 : i32
      %76 = arith.addi %27, %c6_i32 : i32
      %77 = arith.addi %1, %76 : i32
      %78 = arith.index_cast %77 : i32 to index
      %79 = memref.load %arg1[%78] : memref<768xi32, #tpu.memory_space<smem>>
      %80 = arith.index_cast %79 : i32 to index
      %c0_27 = arith.constant 0 : index
      %81 = vector.load %arg3[%80, %c0_27] : memref<512x128xf32, #tpu.memory_space<vmem>>, vector<1x128xf32>
      %82 = arith.index_cast %76 : i32 to index
      %c0_28 = arith.constant 0 : index
      %83 = vector.load %arg5[%82, %c0_28] : memref<256x128xf32, #tpu.memory_space<vmem>>, vector<1x128xf32>
      tpu.vector_store %arg5[%82, %c0_28], %81 {strides = array<i32>} : memref<256x128xf32, #tpu.memory_space<vmem>>, vector<1x128xf32>,
      %c7_i32 = arith.constant 7 : i32
      %84 = arith.addi %27, %c7_i32 : i32
      %85 = arith.addi %1, %84 : i32
      %86 = arith.index_cast %85 : i32 to index
      %87 = memref.load %arg1[%86] : memref<768xi32, #tpu.memory_space<smem>>
      %88 = arith.index_cast %87 : i32 to index
      %c0_29 = arith.constant 0 : index
      %89 = vector.load %arg3[%88, %c0_29] : memref<512x128xf32, #tpu.memory_space<vmem>>, vector<1x128xf32>
      %90 = arith.index_cast %84 : i32 to index
      %c0_30 = arith.constant 0 : index
      %91 = vector.load %arg5[%90, %c0_30] : memref<256x128xf32, #tpu.memory_space<vmem>>, vector<1x128xf32>
      tpu.vector_store %arg5[%90, %c0_30], %89 {strides = array<i32>} : memref<256x128xf32, #tpu.memory_space<vmem>>, vector<1x128xf32>,
    }
    %c32_i32_0 = arith.constant 32 : i32
    %c0 = arith.constant 0 : index
    %c0_1 = arith.constant 0 : index
    %3 = vector.load %arg2[%c0, %c0_1] : memref<256x1xi32, #tpu.memory_space<vmem>>, vector<256x1xi32>
    %c0_2 = arith.constant 0 : index
    %c0_3 = arith.constant 0 : index
    %4 = vector.load %arg4[%c0_2, %c0_3] : memref<8x128xf32, #tpu.memory_space<vmem>>, vector<1x128xf32>
    %c1 = arith.constant 1 : index
    %c0_4 = arith.constant 0 : index
    %5 = vector.load %arg4[%c1, %c0_4] : memref<8x128xf32, #tpu.memory_space<vmem>>, vector<1x128xf32>
    %c2 = arith.constant 2 : index
    %c0_5 = arith.constant 0 : index
    %6 = vector.load %arg4[%c2, %c0_5] : memref<8x128xf32, #tpu.memory_space<vmem>>, vector<1x128xf32>
    %c0_i32_6 = arith.constant 0 : i32
    %7 = vector.broadcast %c0_i32_6 : i32 to vector<256x1xi32>
    %8 = arith.cmpi eq, %3, %7 : vector<256x1xi32>
    %c1_i32_7 = arith.constant 1 : i32
    %9 = vector.broadcast %c1_i32_7 : i32 to vector<256x1xi32>
    %10 = arith.cmpi eq, %3, %9 : vector<256x1xi32>
    %11 = vector.shape_cast %10 : vector<256x1xi1> to vector<256x1xi1>
    %12 = vector.broadcast %11 : vector<256x1xi1> to vector<256x128xi1>
    %13 = vector.shape_cast %5 : vector<1x128xf32> to vector<1x128xf32>
    %14 = vector.broadcast %13 : vector<1x128xf32> to vector<256x128xf32>
    %15 = vector.shape_cast %6 : vector<1x128xf32> to vector<1x128xf32>
    %16 = vector.broadcast %15 : vector<1x128xf32> to vector<256x128xf32>
    %17 = arith.select %12, %14, %16 : vector<256x128xi1>, vector<256x128xf32>
    %18 = vector.shape_cast %8 : vector<256x1xi1> to vector<256x1xi1>
    %19 = vector.broadcast %18 : vector<256x1xi1> to vector<256x128xi1>
    %20 = vector.shape_cast %4 : vector<1x128xf32> to vector<1x128xf32>
    %21 = vector.broadcast %20 : vector<1x128xf32> to vector<256x128xf32>
    %22 = arith.select %19, %21, %17 : vector<256x128xi1>, vector<256x128xf32>
    %c0_8 = arith.constant 0 : index
    %c0_9 = arith.constant 0 : index
    %23 = vector.load %arg5[%c0_8, %c0_9] : memref<256x128xf32, #tpu.memory_space<vmem>>, vector<256x128xf32>
    %24 = arith.addf %23, %22 : vector<256x128xf32>
    %c0_10 = arith.constant 0 : index
    %c0_11 = arith.constant 0 : index
    %25 = vector.load %arg5[%c0_10, %c0_11] : memref<256x128xf32, #tpu.memory_space<vmem>>, vector<256x128xf32>
    tpu.vector_store %arg5[%c0_10, %c0_11], %24 {strides = array<i32>} : memref<256x128xf32, #tpu.memory_space<vmem>>, vector<256x128xf32>,
    return
  }
  func.func @transform_0(%arg0: i32, %arg1: memref<768xi32, #tpu.memory_space<smem>>) -> (i32, i32) {
    %c0_i32 = arith.constant 0 : i32
    %c0_i32_0 = arith.constant 0 : i32
    return %arg0, %c0_i32 : i32, i32
  }
  func.func @transform_1(%arg0: i32, %arg1: memref<768xi32, #tpu.memory_space<smem>>) -> (i32, i32) {
    %c0_i32 = arith.constant 0 : i32
    %c0_i32_0 = arith.constant 0 : i32
    %c0_i32_1 = arith.constant 0 : i32
    return %c0_i32, %c0_i32_0 : i32, i32
  }
  func.func @transform_2(%arg0: i32, %arg1: memref<768xi32, #tpu.memory_space<smem>>) -> (i32, i32) {
    %c0_i32 = arith.constant 0 : i32
    %c0_i32_0 = arith.constant 0 : i32
    %c0_i32_1 = arith.constant 0 : i32
    return %c0_i32, %c0_i32_0 : i32, i32
  }
  func.func @transform_3(%arg0: i32, %arg1: memref<768xi32, #tpu.memory_space<smem>>) -> (i32, i32) {
    %c0_i32 = arith.constant 0 : i32
    %c0_i32_0 = arith.constant 0 : i32
    return %arg0, %c0_i32 : i32, i32
  }
}

</mosaic_0001>

<llo_original>
// kernel: next_utterance_embeds.1
$region0: #{next_utterance_embeds.1}
  #allocation0 [shape = 'u32[]', space=smem, size = 0x4, offset = 0x4, fixed_abs, tag = 'smem constant byte address 0x4 - core index']
  #allocation1 [shape = 'u32[144,128]{1,0:T(1,128)}', space=vmem, size = 0x12000, scoped, tag = 'internal scratch']
  #allocation2 [shape = 's32[1]{0}', space=sflag, size = 0x4, scoped, tag = 'scoped memory for next_utterance_embeds.1']
  #allocation3 [shape = 'u8[3072]{0}', space=smem, size = 0xc00, scoped, tag = 'prefetched SMEM operand 0']
  %s0 = inlined_call_operand.vmem [shape: s32[768], index: 0, kind: input, shape index: {}]
  %s1 = inlined_call_operand.vmem [shape: s32[768,1], index: 1, kind: input, shape index: {}]
  %s2 = inlined_call_operand.vmem [shape: f32[512,128], index: 2, kind: input, shape index: {}]
  %s3 = inlined_call_operand.vmem [shape: f32[8,128], index: 3, kind: input, shape index: {}]
  %s4 = inlined_call_operand.hbm [shape: f32[768,128], index: 4, kind: output, shape index: {}]
  %s5 = sld [smem:[#allocation0]]
  $region52: #{next_utterance_embeds.1} parent=0
    _
  %s7 = ssub.s32 1, %s5
  %s8 = scalar_select 0, %s7, %s5
  %s9 = sshll.u32 %s0, 4
  %s10 = int_to_ptr.vmem [resolvable:$true] %s9
  %12 = dma.vmem_to_smem %s10, 96, [#allocation3], [#allocation2]
  %13 = dma.done [#allocation2], 96
  %14 = sfence
  $region1: #{next_utterance_embeds.1} parent=0
    #allocation4 [shape = 'u8[262144]{0}', space=vmem, size = 0x40000, scoped, tag = 'output window, operand 0']
    #allocation5 [shape = 's32[2]{0}', space=sflag, size = 0x8, scoped, tag = 'scoped memory for next_utterance_embeds.1']
    %15 = vsyncpa [#allocation5], 0
    %s16 = scalar_lea.sflag [#allocation5], 1
    %17 = vsyncpa %s16, 0
    loop: start=0, step=1, limit=5
    $region2: #{next_utterance_embeds.1} parent=1 // loop_pre_header
      _
    $region3: #{next_utterance_embeds.1} parent=1 // loop_header
      %s19 = sphi 0, %s23
      %p20 = scmp.ge.s32.totalorder %s19, 5
      %s29 = sphi 0, %s31
      %s32 = sphi 0, %s29
      %s33 = sphi 0, %s32
      %s49 = sphi 0, %s33
      %s53 = sphi 0, %s53
      %s55 = sphi 0, %s53
      %s56 = sphi 0, %s55
      %s70 = sphi 0, %s56
      %s74 = sphi 0, %s74
      %s76 = sphi 0, %s74
      %s77 = sphi 0, %s76
      %s91 = sphi 0, %s77
      %s97 = sphi 0, %s99
      %s100 = sphi 0, %s97
      %s101 = sphi 0, %s100
      %s117 = sphi 0, %s101
    $region4: #{next_utterance_embeds.1} parent=1 // loop_header_branch
      %22 = sbr.rel (%p20) target = $region8
    $region5: #{next_utterance_embeds.1} parent=1 // loop_body
      %s24 = ssub.s32 %s19, 1
      %s25 = ssub.s32 %s19, 2
      %s26 = sadd.s32 %s19, 1
      %s27 = ssub.s32 %s19, %s26
      %p28 = scmp.eq.s32.totalorder %s27, 0
      %s30 = sadd.s32 %s29, 1
      %s31 = scalar_select %p28, %s29, %s30
      %p34 = pneg %p28
      %p35 = scmp.eq.s32.totalorder %s19, 2
      %p36 = por %p34, %p35
      %p37 = scmp.ne.s32.totalorder %s29, %s32
      %p38 = scmp.eq.s32.totalorder %s19, 0
      %p39 = por %p37, %p38
      %p40 = scmp.ne.s32.totalorder %s29, %s32
      %p41 = scmp.eq.s32.totalorder %s24, 2
      %p42 = por %p40, %p41
      %p43 = scmp.ne.s32.totalorder %s32, %s33
      %p44 = scmp.eq.s32.totalorder %s24, 0
      %p45 = por %p43, %p44
      %p46 = scmp.ne.s32.totalorder %s32, %s33
      %p47 = scmp.eq.s32.totalorder %s25, 2
      %p48 = por %p46, %p47
      %p50 = scmp.ne.s32.totalorder %s33, %s49
      %p51 = scmp.eq.s32.totalorder %s25, 0
      %p52 = por %p50, %p51
      %s54 = sadd.s32 %s53, 1
      %p57 = scmp.eq.s32.totalorder %s19, 2
      %p58 = scmp.ne.s32.totalorder %s53, %s55
      %p59 = scmp.eq.s32.totalorder %s19, 0
      %p60 = por %p58, %p59
      %p61 = scmp.ne.s32.totalorder %s53, %s55
      %p62 = scmp.eq.s32.totalorder %s24, 2
      %p63 = por %p61, %p62
      %p64 = scmp.ne.s32.totalorder %s55, %s56
      %p65 = scmp.eq.s32.totalorder %s24, 0
      %p66 = por %p64, %p65
      %p67 = scmp.ne.s32.totalorder %s55, %s56
      %p68 = scmp.eq.s32.totalorder %s25, 2
      %p69 = por %p67, %p68
      %p71 = scmp.ne.s32.totalorder %s56, %s70
      %p72 = scmp.eq.s32.totalorder %s25, 0
      %p73 = por %p71, %p72
      %s75 = sadd.s32 %s74, 1
      %p78 = scmp.eq.s32.totalorder %s19, 2
      %p79 = scmp.ne.s32.totalorder %s74, %s76
      %p80 = scmp.eq.s32.totalorder %s19, 0
      %p81 = por %p79, %p80
      %p82 = scmp.ne.s32.totalorder %s74, %s76
      %p83 = scmp.eq.s32.totalorder %s24, 2
      %p84 = por %p82, %p83
      %p85 = scmp.ne.s32.totalorder %s76, %s77
      %p86 = scmp.eq.s32.totalorder %s24, 0
      %p87 = por %p85, %p86
      %p88 = scmp.ne.s32.totalorder %s76, %s77
      %p89 = scmp.eq.s32.totalorder %s25, 2
      %p90 = por %p88, %p89
      %p92 = scmp.ne.s32.totalorder %s77, %s91
      %p93 = scmp.eq.s32.totalorder %s25, 0
      %p94 = por %p92, %p93
      %s95 = ssub.s32 %s19, %s26
      %p96 = scmp.eq.s32.totalorder %s95, 0
      %s98 = sadd.s32 %s97, 1
      %s99 = scalar_select %p96, %s97, %s98
      %p102 = pneg %p96
      %p103 = scmp.eq.s32.totalorder %s19, 2
      %p104 = por %p102, %p103
      %p105 = scmp.ne.s32.totalorder %s97, %s100
      %p106 = scmp.eq.s32.totalorder %s19, 0
      %p107 = por %p105, %p106
      %p108 = scmp.ne.s32.totalorder %s97, %s100
      %p109 = scmp.eq.s32.totalorder %s24, 2
      %p110 = por %p108, %p109
      %p111 = scmp.ne.s32.totalorder %s100, %s101
      %p112 = scmp.eq.s32.totalorder %s24, 0
      %p113 = por %p111, %p112
      %p114 = scmp.ne.s32.totalorder %s100, %s101
      %p115 = scmp.eq.s32.totalorder %s25, 2
      %p116 = por %p114, %p115
      %p118 = scmp.ne.s32.totalorder %s101, %s117
      %p119 = scmp.eq.s32.totalorder %s25, 0
      %p120 = por %p118, %p119
      %p121 = scmp.le.s32.totalorder 1, %s19
      %p122 = scmp.lt.s32.totalorder %s19, 4
      %p123 = pnand %p121, %p122
      %p124 = pneg %p123
      // Predicated region
      $region9: #{next_utterance_embeds.1} parent=5 // pred_check
        _
      $region10: #{next_utterance_embeds.1} parent=5 // pred_check_branch
        %126 = sbr.rel (%p123) target = $region12
      $region11: #{next_utterance_embeds.1} parent=5 // pred_region
        %s127 = ssub.s32 %s19, 1
        // Predicated region
        $region13: #{next_utterance_embeds.1} parent=11 // pred_check
          %p128 = pneg %p66
        $region14: #{next_utterance_embeds.1} parent=11 // pred_check_branch
          %130 = sbr.rel (%p128) target = $region16
        $region15: #{next_utterance_embeds.1} parent=11 // pred_region
          _
        $region16: #{next_utterance_embeds.1} parent=11 // pred_fallthru
          _
        // Predicated region
        $region17: #{next_utterance_embeds.1} parent=11 // pred_check
          %p131 = pneg %p87
        $region18: #{next_utterance_embeds.1} parent=11 // pred_check_branch
          %133 = sbr.rel (%p131) target = $region20
        $region19: #{next_utterance_embeds.1} parent=11 // pred_region
          _
        $region20: #{next_utterance_embeds.1} parent=11 // pred_fallthru
          _
      $region12: #{next_utterance_embeds.1} parent=5 // pred_fallthru
        _
      %p134 = scmp.lt.s32.totalorder %s19, 3
      // Predicated region
      $region21: #{next_utterance_embeds.1} parent=5 // pred_check
        %p135 = pneg %p134
      $region22: #{next_utterance_embeds.1} parent=5 // pred_check_branch
        %137 = sbr.rel (%p135) target = $region24
      $region23: #{next_utterance_embeds.1} parent=5 // pred_region
        // Predicated region
        $region25: #{next_utterance_embeds.1} parent=23 // pred_check
          %p138 = pneg %p39
        $region26: #{next_utterance_embeds.1} parent=23 // pred_check_branch
          %140 = sbr.rel (%p138) target = $region28
        $region27: #{next_utterance_embeds.1} parent=23 // pred_region
          %s141 = smul.u32 32, %s19
          %p142 = scmp.lt.s32.totalorder %s141, 95
          %s143 = scalar_select %p142, %s141, 95
          %s144 = smul.addr %s143, 8
          %s145 = scalar_lea.vmem %s1, %s144
          %s146 = smul.u32 32, %s19
        $region28: #{next_utterance_embeds.1} parent=23 // pred_fallthru
          _
      $region24: #{next_utterance_embeds.1} parent=5 // pred_fallthru
        _
      %p147 = scmp.le.s32.totalorder 1, %s19
      %p148 = scmp.lt.s32.totalorder %s19, 4
      %p149 = pnand %p147, %p148
      %p150 = pneg %p149
      // Predicated region
      $region29: #{next_utterance_embeds.1} parent=5 // pred_check
        _
      $region30: #{next_utterance_embeds.1} parent=5 // pred_check_branch
        %152 = sbr.rel (%p149) target = $region32
      $region31: #{next_utterance_embeds.1} parent=5 // pred_region
        %s153 = ssub.s32 %s19, 1
        %s154 = smul.u32 32, %s24
        %p155 = scmp.lt.s32.totalorder %s154, 95
        %s156 = scalar_select %p155, %s154, 95
        %s157 = smul.addr %s156, 8
        %s158 = scalar_lea.vmem %s1, %s157
        %p159 = pneg %p45
        %p160 = pneg %p42
        %p161 = pneg %p66
        %p162 = pneg %p63
        %p163 = pneg %p87
        %p164 = pneg %p84
        %p165 = pneg %p113
        %p166 = pneg %p110
        %s167 = sand.u32 %s100, 1
        %s168 = scalar_lea.sflag [#allocation5], %s167
        %s169 = sand.u32 %s100, 1
        %s170 = smul.addr %s169, 256
        %s171 = scalar_lea.vmem [#allocation4], %s170
        %s172 = smul.u32 32, %s24
        %p173 = scmp.lt.s32.totalorder %s172, 95
        %s174 = scalar_select %p173, %s172, 95
        %s175 = smul.addr %s174, 8
        %s176 = scalar_lea.vmem %s1, %s175
        %s177 = smul.u32 32, %s24
        %s178 = smul.u32 32, %s24
        %s179 = smul.u32 %s24, 256
        loop: start=0, step=1, limit=32
        $region33: #{next_utterance_embeds.1} parent=31 // loop_pre_header
          _
        $region34: #{next_utterance_embeds.1} parent=31 // loop_header
          %s181 = sphi 0, %s185
          %p182 = scmp.ge.s32.totalorder %s181, 32
        $region35: #{next_utterance_embeds.1} parent=31 // loop_header_branch
          %184 = sbr.rel (%p182) target = $region39
        $region36: #{next_utterance_embeds.1} parent=31 // loop_body
          %s186 = smul.u32 %s181, 8
          %s187 = sadd.s32 %s179, %s186
          %s188 = sld [smem:[#allocation3 + %s187]]
          %s189 = scalar_lea.vmem %s2, %s188
          %v190 = vld [vmem:[%s189] sm:$0x1]
          %s191 = scalar_lea.vmem %s171, %s186 [#allocation4]
          %192 = vst [vmem:[%s191] sm:$0x1] %v190
          %s193 = sadd.s32 %s186, 1
          %s194 = sadd.s32 %s179, %s193
          %s195 = sld [smem:[#allocation3 + %s194]]
          %s196 = scalar_lea.vmem %s2, %s195
          %v197 = vld [vmem:[%s196] sm:$0x1]
          %s198 = scalar_lea.vmem %s171, %s193 [#allocation4]
          %199 = vst [vmem:[%s198] sm:$0x1] %v197
          %s200 = sadd.s32 %s186, 2
          %s201 = sadd.s32 %s179, %s200
          %s202 = sld [smem:[#allocation3 + %s201]]
          %s203 = scalar_lea.vmem %s2, %s202
          %v204 = vld [vmem:[%s203] sm:$0x1]
          %s205 = scalar_lea.vmem %s171, %s200 [#allocation4]
          %206 = vst [vmem:[%s205] sm:$0x1] %v204
          %s207 = sadd.s32 %s186, 3
          %s208 = sadd.s32 %s179, %s207
          %s209 = sld [smem:[#allocation3 + %s208]]
          %s210 = scalar_lea.vmem %s2, %s209
          %v211 = vld [vmem:[%s210] sm:$0x1]
          %s212 = scalar_lea.vmem %s171, %s207 [#allocation4]
          %213 = vst [vmem:[%s212] sm:$0x1] %v211
          %s214 = sadd.s32 %s186, 4
          %s215 = sadd.s32 %s179, %s214
          %s216 = sld [smem:[#allocation3 + %s215]]
          %s217 = scalar_lea.vmem %s2, %s216
          %v218 = vld [vmem:[%s217] sm:$0x1]
          %s219 = scalar_lea.vmem %s171, %s214 [#allocation4]
          %220 = vst [vmem:[%s219] sm:$0x1] %v218
          %s221 = sadd.s32 %s186, 5
          %s222 = sadd.s32 %s179, %s221
          %s223 = sld [smem:[#allocation3 + %s222]]
          %s224 = scalar_lea.vmem %s2, %s223
          %v225 = vld [vmem:[%s224] sm:$0x1]
          %s226 = scalar_lea.vmem %s171, %s221 [#allocation4]
          %227 = vst [vmem:[%s226] sm:$0x1] %v225
          %s228 = sadd.s32 %s186, 6
          %s229 = sadd.s32 %s179, %s228
          %s230 = sld [smem:[#allocation3 + %s229]]
          %s231 = scalar_lea.vmem %s2, %s230
          %v232 = vld [vmem:[%s231] sm:$0x1]
          %s233 = scalar_lea.vmem %s171, %s228 [#allocation4]
          %234 = vst [vmem:[%s233] sm:$0x1] %v232
          %s235 = sadd.s32 %s186, 7
          %s236 = sadd.s32 %s179, %s235
          %s237 = sld [smem:[#allocation3 + %s236]]
          %s238 = scalar_lea.vmem %s2, %s237
          %v239 = vld [vmem:[%s238] sm:$0x1]
          %s240 = scalar_lea.vmem %s171, %s235 [#allocation4]
          %241 = vst [vmem:[%s240] sm:$0x1] %v239
        $region37: #{next_utterance_embeds.1} parent=31 // loop_footer
          %s185 = sadd.s32 1, %s181
        $region38: #{next_utterance_embeds.1} parent=31 // loop_footer_branch
          %180 = sbr.rel target = $region34
        $region39: #{next_utterance_embeds.1} parent=31 // loop_exit
          _
        %v242 = vld [vmem:[%s176] sm:$0xff]
        %v243 = vld [vmem:[%s176 + $0x8] sm:$0xff]
        %v244 = vld [vmem:[%s176 + $0x10] sm:$0xff]
        %v245 = vld [vmem:[%s176 + $0x18] sm:$0xff]
        %v246 = vld [vmem:[%s176 + $0x20] sm:$0xff]
        %v247 = vld [vmem:[%s176 + $0x28] sm:$0xff]
        %v248 = vld [vmem:[%s176 + $0x30] sm:$0xff]
        %v249 = vld [vmem:[%s176 + $0x38] sm:$0xff]
        %v250 = vld [vmem:[%s176 + $0x40] sm:$0xff]
        %v251 = vld [vmem:[%s176 + $0x48] sm:$0xff]
        %v252 = vld [vmem:[%s176 + $0x50] sm:$0xff]
        %v253 = vld [vmem:[%s176 + $0x58] sm:$0xff]
        %v254 = vld [vmem:[%s176 + $0x60] sm:$0xff]
        %v255 = vld [vmem:[%s176 + $0x68] sm:$0xff]
        %v256 = vld [vmem:[%s176 + $0x70] sm:$0xff]
        %v257 = vld [vmem:[%s176 + $0x78] sm:$0xff]
        %v258 = vld [vmem:[%s176 + $0x80] sm:$0xff]
        %v259 = vld [vmem:[%s176 + $0x88] sm:$0xff]
        %v260 = vld [vmem:[%s176 + $0x90] sm:$0xff]
        %v261 = vld [vmem:[%s176 + $0x98] sm:$0xff]
        %v262 = vld [vmem:[%s176 + $0xa0] sm:$0xff]
        %v263 = vld [vmem:[%s176 + $0xa8] sm:$0xff]
        %v264 = vld [vmem:[%s176 + $0xb0] sm:$0xff]
        %v265 = vld [vmem:[%s176 + $0xb8] sm:$0xff]
        %v266 = vld [vmem:[%s176 + $0xc0] sm:$0xff]
        %v267 = vld [vmem:[%s176 + $0xc8] sm:$0xff]
        %v268 = vld [vmem:[%s176 + $0xd0] sm:$0xff]
        %v269 = vld [vmem:[%s176 + $0xd8] sm:$0xff]
        %v270 = vld [vmem:[%s176 + $0xe0] sm:$0xff]
        %v271 = vld [vmem:[%s176 + $0xe8] sm:$0xff]
        %v272 = vld [vmem:[%s176 + $0xf0] sm:$0xff]
        %v273 = vld [vmem:[%s176 + $0xf8] sm:$0xff]
        %v274 = vld [vmem:[%s3] sm:$0x1]
        %v275 = vld [vmem:[%s3 + $0x1] sm:$0x1]
        %v276 = vld [vmem:[%s3 + $0x2] sm:$0x1]
        %vm277 = vcmp.eq.s32.totalorder %v242, 0
        %vm278 = vcmp.eq.s32.totalorder %v243, 0
        %vm279 = vcmp.eq.s32.totalorder %v244, 0
        %vm280 = vcmp.eq.s32.totalorder %v245, 0
        %vm281 = vcmp.eq.s32.totalorder %v246, 0
        %vm282 = vcmp.eq.s32.totalorder %v247, 0
        %vm283 = vcmp.eq.s32.totalorder %v248, 0
        %vm284 = vcmp.eq.s32.totalorder %v249, 0
        %vm285 = vcmp.eq.s32.totalorder %v250, 0
        %vm286 = vcmp.eq.s32.totalorder %v251, 0
        %vm287 = vcmp.eq.s32.totalorder %v252, 0
        %vm288 = vcmp.eq.s32.totalorder %v253, 0
        %vm289 = vcmp.eq.s32.totalorder %v254, 0
        %vm290 = vcmp.eq.s32.totalorder %v255, 0
        %vm291 = vcmp.eq.s32.totalorder %v256, 0
        %vm292 = vcmp.eq.s32.totalorder %v257, 0
        %vm293 = vcmp.eq.s32.totalorder %v258, 0
        %vm294 = vcmp.eq.s32.totalorder %v259, 0
        %vm295 = vcmp.eq.s32.totalorder %v260, 0
        %vm296 = vcmp.eq.s32.totalorder %v261, 0
        %vm297 = vcmp.eq.s32.totalorder %v262, 0
        %vm298 = vcmp.eq.s32.totalorder %v263, 0
        %vm299 = vcmp.eq.s32.totalorder %v264, 0
        %vm300 = vcmp.eq.s32.totalorder %v265, 0
        %vm301 = vcmp.eq.s32.totalorder %v266, 0
        %vm302 = vcmp.eq.s32.totalorder %v267, 0
        %vm303 = vcmp.eq.s32.totalorder %v268, 0
        %vm304 = vcmp.eq.s32.totalorder %v269, 0
        %vm305 = vcmp.eq.s32.totalorder %v270, 0
        %vm306 = vcmp.eq.s32.totalorder %v271, 0
        %vm307 = vcmp.eq.s32.totalorder %v272, 0
        %vm308 = vcmp.eq.s32.totalorder %v273, 0
        %vm309 = vcmp.eq.s32.totalorder %v242, 1
        %vm310 = vcmp.eq.s32.totalorder %v243, 1
        %vm311 = vcmp.eq.s32.totalorder %v244, 1
        %vm312 = vcmp.eq.s32.totalorder %v245, 1
        %vm313 = vcmp.eq.s32.totalorder %v246, 1
        %vm314 = vcmp.eq.s32.totalorder %v247, 1
        %vm315 = vcmp.eq.s32.totalorder %v248, 1
        %vm316 = vcmp.eq.s32.totalorder %v249, 1
        %vm317 = vcmp.eq.s32.totalorder %v250, 1
        %vm318 = vcmp.eq.s32.totalorder %v251, 1
        %vm319 = vcmp.eq.s32.totalorder %v252, 1
        %vm320 = vcmp.eq.s32.totalorder %v253, 1
        %vm321 = vcmp.eq.s32.totalorder %v254, 1
        %vm322 = vcmp.eq.s32.totalorder %v255, 1
        %vm323 = vcmp.eq.s32.totalorder %v256, 1
        %vm324 = vcmp.eq.s32.totalorder %v257, 1
        %vm325 = vcmp.eq.s32.totalorder %v258, 1
        %vm326 = vcmp.eq.s32.totalorder %v259, 1
        %vm327 = vcmp.eq.s32.totalorder %v260, 1
        %vm328 = vcmp.eq.s32.totalorder %v261, 1
        %vm329 = vcmp.eq.s32.totalorder %v262, 1
        %vm330 = vcmp.eq.s32.totalorder %v263, 1
        %vm331 = vcmp.eq.s32.totalorder %v264, 1
        %vm332 = vcmp.eq.s32.totalorder %v265, 1
        %vm333 = vcmp.eq.s32.totalorder %v266, 1
        %vm334 = vcmp.eq.s32.totalorder %v267, 1
        %vm335 = vcmp.eq.s32.totalorder %v268, 1
        %vm336 = vcmp.eq.s32.totalorder %v269, 1
        %vm337 = vcmp.eq.s32.totalorder %v270, 1
        %vm338 = vcmp.eq.s32.totalorder %v271, 1
        %vm339 = vcmp.eq.s32.totalorder %v272, 1
        %vm340 = vcmp.eq.s32.totalorder %v273, 1
        %v341 = vsel %vm309, 1, 0
        %v342 = vsel %vm310, 1, 0
        %v343 = vsel %vm311, 1, 0
        %v344 = vsel %vm312, 1, 0
        %v345 = vsel %vm313, 1, 0
        %v346 = vsel %vm314, 1, 0
        %v347 = vsel %vm315, 1, 0
        %v348 = vsel %vm316, 1, 0
        %v349 = vsel %vm317, 1, 0
        %v350 = vsel %vm318, 1, 0
        %v351 = vsel %vm319, 1, 0
        %v352 = vsel %vm320, 1, 0
        %v353 = vsel %vm321, 1, 0
        %v354 = vsel %vm322, 1, 0
        %v355 = vsel %vm323, 1, 0
        %v356 = vsel %vm324, 1, 0
        %v357 = vsel %vm325, 1, 0
        %v358 = vsel %vm326, 1, 0
        %v359 = vsel %vm327, 1, 0
        %v360 = vsel %vm328, 1, 0
        %v361 = vsel %vm329, 1, 0
        %v362 = vsel %vm330, 1, 0
        %v363 = vsel %vm331, 1, 0
        %v364 = vsel %vm332, 1, 0
        %v365 = vsel %vm333, 1, 0
        %v366 = vsel %vm334, 1, 0
        %v367 = vsel %vm335, 1, 0
        %v368 = vsel %vm336, 1, 0
        %v369 = vsel %vm337, 1, 0
        %v370 = vsel %vm338, 1, 0
        %v371 = vsel %vm339, 1, 0
        %v372 = vsel %vm340, 1, 0
        %373 = vset.pattern.permute.xlu0 0
        %374 = vperm.xlu0 %373, %v341
        %v375 = vpop.permute.xlu0 %374
        %376 = vset.pattern.permute.xlu0 0
        %377 = vperm.xlu0 %376, %v342
        %v378 = vpop.permute.xlu0 %377
        %379 = vset.pattern.permute.xlu0 0
        %380 = vperm.xlu0 %379, %v343
        %v381 = vpop.permute.xlu0 %380
        %382 = vset.pattern.permute.xlu0 0
        %383 = vperm.xlu0 %382, %v344
        %v384 = vpop.permute.xlu0 %383
        %385 = vset.pattern.permute.xlu0 0
        %386 = vperm.xlu0 %385, %v345
        %v387 = vpop.permute.xlu0 %386
        %388 = vset.pattern.permute.xlu0 0
        %389 = vperm.xlu0 %388, %v346
        %v390 = vpop.permute.xlu0 %389
        %391 = vset.pattern.permute.xlu0 0
        %392 = vperm.xlu0 %391, %v347
        %v393 = vpop.permute.xlu0 %392
        %394 = vset.pattern.permute.xlu0 0
        %395 = vperm.xlu0 %394, %v348
        %v396 = vpop.permute.xlu0 %395
        %397 = vset.pattern.permute.xlu0 0
        %398 = vperm.xlu0 %397, %v349
        %v399 = vpop.permute.xlu0 %398
        %400 = vset.pattern.permute.xlu0 0
        %401 = vperm.xlu0 %400, %v350
        %v402 = vpop.permute.xlu0 %401
        %403 = vset.pattern.permute.xlu0 0
        %404 = vperm.xlu0 %403, %v351
        %v405 = vpop.permute.xlu0 %404
        %406 = vset.pattern.permute.xlu0 0
        %407 = vperm.xlu0 %406, %v352
        %v408 = vpop.permute.xlu0 %407
        %409 = vset.pattern.permute.xlu0 0
        %410 = vperm.xlu0 %409, %v353
        %v411 = vpop.permute.xlu0 %410
        %412 = vset.pattern.permute.xlu0 0
        %413 = vperm.xlu0 %412, %v354
        %v414 = vpop.permute.xlu0 %413
        %415 = vset.pattern.permute.xlu0 0
        %416 = vperm.xlu0 %415, %v355
        %v417 = vpop.permute.xlu0 %416
        %418 = vset.pattern.permute.xlu0 0
        %419 = vperm.xlu0 %418, %v356
        %v420 = vpop.permute.xlu0 %419
        %421 = vset.pattern.permute.xlu0 0
        %422 = vperm.xlu0 %421, %v357
        %v423 = vpop.permute.xlu0 %422
        %424 = vset.pattern.permute.xlu0 0
        %425 = vperm.xlu0 %424, %v358
        %v426 = vpop.permute.xlu0 %425
        %427 = vset.pattern.permute.xlu0 0
        %428 = vperm.xlu0 %427, %v359
        %v429 = vpop.permute.xlu0 %428
        %430 = vset.pattern.permute.xlu0 0
        %431 = vperm.xlu0 %430, %v360
        %v432 = vpop.permute.xlu0 %431
        %433 = vset.pattern.permute.xlu0 0
        %434 = vperm.xlu0 %433, %v361
        %v435 = vpop.permute.xlu0 %434
        %436 = vset.pattern.permute.xlu0 0
        %437 = vperm.xlu0 %436, %v362
        %v438 = vpop.permute.xlu0 %437
        %439 = vset.pattern.permute.xlu0 0
        %440 = vperm.xlu0 %439, %v363
        %v441 = vpop.permute.xlu0 %440
        %442 = vset.pattern.permute.xlu0 0
        %443 = vperm.xlu0 %442, %v364
        %v444 = vpop.permute.xlu0 %443
        %445 = vset.pattern.permute.xlu0 0
        %446 = vperm.xlu0 %445, %v365
        %v447 = vpop.permute.xlu0 %446
        %448 = vset.pattern.permute.xlu0 0
        %449 = vperm.xlu0 %448, %v366
        %v450 = vpop.permute.xlu0 %449
        %451 = vset.pattern.permute.xlu0 0
        %452 = vperm.xlu0 %451, %v367
        %v453 = vpop.permute.xlu0 %452
        %454 = vset.pattern.permute.xlu0 0
        %455 = vperm.xlu0 %454, %v368
        %v456 = vpop.permute.xlu0 %455
        %457 = vset.pattern.permute.xlu0 0
        %458 = vperm.xlu0 %457, %v369
        %v459 = vpop.permute.xlu0 %458
        %460 = vset.pattern.permute.xlu0 0
        %461 = vperm.xlu0 %460, %v370
        %v462 = vpop.permute.xlu0 %461
        %463 = vset.pattern.permute.xlu0 0
        %464 = vperm.xlu0 %463, %v371
        %v465 = vpop.permute.xlu0 %464
        %466 = vset.pattern.permute.xlu0 0
        %467 = vperm.xlu0 %466, %v372
        %v468 = vpop.permute.xlu0 %467
        %vm469 = vcmp.eq.s32.totalorder %v375, 1
        %vm470 = vcmp.eq.s32.totalorder %v378, 1
        %vm471 = vcmp.eq.s32.totalorder %v381, 1
        %vm472 = vcmp.eq.s32.totalorder %v384, 1
        %vm473 = vcmp.eq.s32.totalorder %v387, 1
        %vm474 = vcmp.eq.s32.totalorder %v390, 1
        %vm475 = vcmp.eq.s32.totalorder %v393, 1
        %vm476 = vcmp.eq.s32.totalorder %v396, 1
        %vm477 = vcmp.eq.s32.totalorder %v399, 1
        %vm478 = vcmp.eq.s32.totalorder %v402, 1
        %vm479 = vcmp.eq.s32.totalorder %v405, 1
        %vm480 = vcmp.eq.s32.totalorder %v408, 1
        %vm481 = vcmp.eq.s32.totalorder %v411, 1
        %vm482 = vcmp.eq.s32.totalorder %v414, 1
        %vm483 = vcmp.eq.s32.totalorder %v417, 1
        %vm484 = vcmp.eq.s32.totalorder %v420, 1
        %vm485 = vcmp.eq.s32.totalorder %v423, 1
        %vm486 = vcmp.eq.s32.totalorder %v426, 1
        %vm487 = vcmp.eq.s32.totalorder %v429, 1
        %vm488 = vcmp.eq.s32.totalorder %v432, 1
        %vm489 = vcmp.eq.s32.totalorder %v435, 1
        %vm490 = vcmp.eq.s32.totalorder %v438, 1
        %vm491 = vcmp.eq.s32.totalorder %v441, 1
        %vm492 = vcmp.eq.s32.totalorder %v444, 1
        %vm493 = vcmp.eq.s32.totalorder %v447, 1
        %vm494 = vcmp.eq.s32.totalorder %v450, 1
        %vm495 = vcmp.eq.s32.totalorder %v453, 1
        %vm496 = vcmp.eq.s32.totalorder %v456, 1
        %vm497 = vcmp.eq.s32.totalorder %v459, 1
        %vm498 = vcmp.eq.s32.totalorder %v462, 1
        %vm499 = vcmp.eq.s32.totalorder %v465, 1
        %vm500 = vcmp.eq.s32.totalorder %v468, 1
        %v501 = vlaneseq
        %v502 = vshrl.u32 %v501, 7
        %v503 = vsub.s32 0, %v502
        %v504 = vrot.slane %v275, %v503
        %v505 = vlaneseq
        %v506 = vshrl.u32 %v505, 7
        %v507 = vsub.s32 0, %v506
        %v508 = vrot.slane %v276, %v507
        %v509 = vsel %vm469, %v504, %v508
        %v510 = vsel %vm470, %v504, %v508
        %v511 = vsel %vm471, %v504, %v508
        %v512 = vsel %vm472, %v504, %v508
        %v513 = vsel %vm473, %v504, %v508
        %v514 = vsel %vm474, %v504, %v508
        %v515 = vsel %vm475, %v504, %v508
        %v516 = vsel %vm476, %v504, %v508
        %v517 = vsel %vm477, %v504, %v508
        %v518 = vsel %vm478, %v504, %v508
        %v519 = vsel %vm479, %v504, %v508
        %v520 = vsel %vm480, %v504, %v508
        %v521 = vsel %vm481, %v504, %v508
        %v522 = vsel %vm482, %v504, %v508
        %v523 = vsel %vm483, %v504, %v508
        %v524 = vsel %vm484, %v504, %v508
        %v525 = vsel %vm485, %v504, %v508
        %v526 = vsel %vm486, %v504, %v508
        %v527 = vsel %vm487, %v504, %v508
        %v528 = vsel %vm488, %v504, %v508
        %v529 = vsel %vm489, %v504, %v508
        %v530 = vsel %vm490, %v504, %v508
        %v531 = vsel %vm491, %v504, %v508
        %v532 = vsel %vm492, %v504, %v508
        %v533 = vsel %vm493, %v504, %v508
        %v534 = vsel %vm494, %v504, %v508
        %v535 = vsel %vm495, %v504, %v508
        %v536 = vsel %vm496, %v504, %v508
        %v537 = vsel %vm497, %v504, %v508
        %v538 = vsel %vm498, %v504, %v508
        %v539 = vsel %vm499, %v504, %v508
        %v540 = vsel %vm500, %v504, %v508
        %v541 = vsel %vm277, 1, 0
        %v542 = vsel %vm278, 1, 0
        %v543 = vsel %vm279, 1, 0
        %v544 = vsel %vm280, 1, 0
        %v545 = vsel %vm281, 1, 0
        %v546 = vsel %vm282, 1, 0
        %v547 = vsel %vm283, 1, 0
        %v548 = vsel %vm284, 1, 0
        %v549 = vsel %vm285, 1, 0
        %v550 = vsel %vm286, 1, 0
        %v551 = vsel %vm287, 1, 0
        %v552 = vsel %vm288, 1, 0
        %v553 = vsel %vm289, 1, 0
        %v554 = vsel %vm290, 1, 0
        %v555 = vsel %vm291, 1, 0
        %v556 = vsel %vm292, 1, 0
        %v557 = vsel %vm293, 1, 0
        %v558 = vsel %vm294, 1, 0
        %v559 = vsel %vm295, 1, 0
        %v560 = vsel %vm296, 1, 0
        %v561 = vsel %vm297, 1, 0
        %v562 = vsel %vm298, 1, 0
        %v563 = vsel %vm299, 1, 0
        %v564 = vsel %vm300, 1, 0
        %v565 = vsel %vm301, 1, 0
        %v566 = vsel %vm302, 1, 0
        %v567 = vsel %vm303, 1, 0
        %v568 = vsel %vm304, 1, 0
        %v569 = vsel %vm305, 1, 0
        %v570 = vsel %vm306, 1, 0
        %v571 = vsel %vm307, 1, 0
        %v572 = vsel %vm308, 1, 0
        %573 = vset.pattern.permute.xlu0 0
        %574 = vperm.xlu0 %573, %v541
        %v575 = vpop.permute.xlu0 %574
        %576 = vset.pattern.permute.xlu0 0
        %577 = vperm.xlu0 %576, %v542
        %v578 = vpop.permute.xlu0 %577
        %579 = vset.pattern.permute.xlu0 0
        %580 = vperm.xlu0 %579, %v543
        %v581 = vpop.permute.xlu0 %580
        %582 = vset.pattern.permute.xlu0 0
        %583 = vperm.xlu0 %582, %v544
        %v584 = vpop.permute.xlu0 %583
        %585 = vset.pattern.permute.xlu0 0
        %586 = vperm.xlu0 %585, %v545
        %v587 = vpop.permute.xlu0 %586
        %588 = vset.pattern.permute.xlu0 0
        %589 = vperm.xlu0 %588, %v546
        %v590 = vpop.permute.xlu0 %589
        %591 = vset.pattern.permute.xlu0 0
        %592 = vperm.xlu0 %591, %v547
        %v593 = vpop.permute.xlu0 %592
        %594 = vset.pattern.permute.xlu0 0
        %595 = vperm.xlu0 %594, %v548
        %v596 = vpop.permute.xlu0 %595
        %597 = vset.pattern.permute.xlu0 0
        %598 = vperm.xlu0 %597, %v549
        %v599 = vpop.permute.xlu0 %598
        %600 = vset.pattern.permute.xlu0 0
        %601 = vperm.xlu0 %600, %v550
        %v602 = vpop.permute.xlu0 %601
        %603 = vset.pattern.permute.xlu0 0
        %604 = vperm.xlu0 %603, %v551
        %v605 = vpop.permute.xlu0 %604
        %606 = vset.pattern.permute.xlu0 0
        %607 = vperm.xlu0 %606, %v552
        %v608 = vpop.permute.xlu0 %607
        %609 = vset.pattern.permute.xlu0 0
        %610 = vperm.xlu0 %609, %v553
        %v611 = vpop.permute.xlu0 %610
        %612 = vset.pattern.permute.xlu0 0
        %613 = vperm.xlu0 %612, %v554
        %v614 = vpop.permute.xlu0 %613
        %615 = vset.pattern.permute.xlu0 0
        %616 = vperm.xlu0 %615, %v555
        %v617 = vpop.permute.xlu0 %616
        %618 = vset.pattern.permute.xlu0 0
        %619 = vperm.xlu0 %618, %v556
        %v620 = vpop.permute.xlu0 %619
        %621 = vset.pattern.permute.xlu0 0
        %622 = vperm.xlu0 %621, %v557
        %v623 = vpop.permute.xlu0 %622
        %624 = vset.pattern.permute.xlu0 0
        %625 = vperm.xlu0 %624, %v558
        %v626 = vpop.permute.xlu0 %625
        %627 = vset.pattern.permute.xlu0 0
        %628 = vperm.xlu0 %627, %v559
        %v629 = vpop.permute.xlu0 %628
        %630 = vset.pattern.permute.xlu0 0
        %631 = vperm.xlu0 %630, %v560
        %v632 = vpop.permute.xlu0 %631
        %633 = vset.pattern.permute.xlu0 0
        %634 = vperm.xlu0 %633, %v561
        %v635 = vpop.permute.xlu0 %634
        %636 = vset.pattern.permute.xlu0 0
        %637 = vperm.xlu0 %636, %v562
        %v638 = vpop.permute.xlu0 %637
        %639 = vset.pattern.permute.xlu0 0
        %640 = vperm.xlu0 %639, %v563
        %v641 = vpop.permute.xlu0 %640
        %642 = vset.pattern.permute.xlu0 0
        %643 = vperm.xlu0 %642, %v564
        %v644 = vpop.permute.xlu0 %643
        %645 = vset.pattern.permute.xlu0 0
        %646 = vperm.xlu0 %645, %v565
        %v647 = vpop.permute.xlu0 %646
        %648 = vset.pattern.permute.xlu0 0
        %649 = vperm.xlu0 %648, %v566
        %v650 = vpop.permute.xlu0 %649
        %651 = vset.pattern.permute.xlu0 0
        %652 = vperm.xlu0 %651, %v567
        %v653 = vpop.permute.xlu0 %652
        %654 = vset.pattern.permute.xlu0 0
        %655 = vperm.xlu0 %654, %v568
        %v656 = vpop.permute.xlu0 %655
        %657 = vset.pattern.permute.xlu0 0
        %658 = vperm.xlu0 %657, %v569
        %v659 = vpop.permute.xlu0 %658
        %660 = vset.pattern.permute.xlu0 0
        %661 = vperm.xlu0 %660, %v570
        %v662 = vpop.permute.xlu0 %661
        %663 = vset.pattern.permute.xlu0 0
        %664 = vperm.xlu0 %663, %v571
        %v665 = vpop.permute.xlu0 %664
        %666 = vset.pattern.permute.xlu0 0
        %667 = vperm.xlu0 %666, %v572
        %v668 = vpop.permute.xlu0 %667
        %vm669 = vcmp.eq.s32.totalorder %v575, 1
        %vm670 = vcmp.eq.s32.totalorder %v578, 1
        %vm671 = vcmp.eq.s32.totalorder %v581, 1
        %vm672 = vcmp.eq.s32.totalorder %v584, 1
        %vm673 = vcmp.eq.s32.totalorder %v587, 1
        %vm674 = vcmp.eq.s32.totalorder %v590, 1
        %vm675 = vcmp.eq.s32.totalorder %v593, 1
        %vm676 = vcmp.eq.s32.totalorder %v596, 1
        %vm677 = vcmp.eq.s32.totalorder %v599, 1
        %vm678 = vcmp.eq.s32.totalorder %v602, 1
        %vm679 = vcmp.eq.s32.totalorder %v605, 1
        %vm680 = vcmp.eq.s32.totalorder %v608, 1
        %vm681 = vcmp.eq.s32.totalorder %v611, 1
        %vm682 = vcmp.eq.s32.totalorder %v614, 1
        %vm683 = vcmp.eq.s32.totalorder %v617, 1
        %vm684 = vcmp.eq.s32.totalorder %v620, 1
        %vm685 = vcmp.eq.s32.totalorder %v623, 1
        %vm686 = vcmp.eq.s32.totalorder %v626, 1
        %vm687 = vcmp.eq.s32.totalorder %v629, 1
        %vm688 = vcmp.eq.s32.totalorder %v632, 1
        %vm689 = vcmp.eq.s32.totalorder %v635, 1
        %vm690 = vcmp.eq.s32.totalorder %v638, 1
        %vm691 = vcmp.eq.s32.totalorder %v641, 1
        %vm692 = vcmp.eq.s32.totalorder %v644, 1
        %vm693 = vcmp.eq.s32.totalorder %v647, 1
        %vm694 = vcmp.eq.s32.totalorder %v650, 1
        %vm695 = vcmp.eq.s32.totalorder %v653, 1
        %vm696 = vcmp.eq.s32.totalorder %v656, 1
        %vm697 = vcmp.eq.s32.totalorder %v659, 1
        %vm698 = vcmp.eq.s32.totalorder %v662, 1
        %vm699 = vcmp.eq.s32.totalorder %v665, 1
        %vm700 = vcmp.eq.s32.totalorder %v668, 1
        %v701 = vlaneseq
        %v702 = vshrl.u32 %v701, 7
        %v703 = vsub.s32 0, %v702
        %v704 = vrot.slane %v274, %v703
        %v705 = vsel %vm669, %v704, %v509
        %v706 = vsel %vm670, %v704, %v510
        %v707 = vsel %vm671, %v704, %v511
        %v708 = vsel %vm672, %v704, %v512
        %v709 = vsel %vm673, %v704, %v513
        %v710 = vsel %vm674, %v704, %v514
        %v711 = vsel %vm675, %v704, %v515
        %v712 = vsel %vm676, %v704, %v516
        %v713 = vsel %vm677, %v704, %v517
        %v714 = vsel %vm678, %v704, %v518
        %v715 = vsel %vm679, %v704, %v519
        %v716 = vsel %vm680, %v704, %v520
        %v717 = vsel %vm681, %v704, %v521
        %v718 = vsel %vm682, %v704, %v522
        %v719 = vsel %vm683, %v704, %v523
        %v720 = vsel %vm684, %v704, %v524
        %v721 = vsel %vm685, %v704, %v525
        %v722 = vsel %vm686, %v704, %v526
        %v723 = vsel %vm687, %v704, %v527
        %v724 = vsel %vm688, %v704, %v528
        %v725 = vsel %vm689, %v704, %v529
        %v726 = vsel %vm690, %v704, %v530
        %v727 = vsel %vm691, %v704, %v531
        %v728 = vsel %vm692, %v704, %v532
        %v729 = vsel %vm693, %v704, %v533
        %v730 = vsel %vm694, %v704, %v534
        %v731 = vsel %vm695, %v704, %v535
        %v732 = vsel %vm696, %v704, %v536
        %v733 = vsel %vm697, %v704, %v537
        %v734 = vsel %vm698, %v704, %v538
        %v735 = vsel %vm699, %v704, %v539
        %v736 = vsel %vm700, %v704, %v540
        %v737 = vld [vmem:[%s171] sm:$0xff]
        %v738 = vld [vmem:[%s171 + $0x8] sm:$0xff]
        %v739 = vld [vmem:[%s171 + $0x10] sm:$0xff]
        %v740 = vld [vmem:[%s171 + $0x18] sm:$0xff]
        %v741 = vld [vmem:[%s171 + $0x20] sm:$0xff]
        %v742 = vld [vmem:[%s171 + $0x28] sm:$0xff]
        %v743 = vld [vmem:[%s171 + $0x30] sm:$0xff]
        %v744 = vld [vmem:[%s171 + $0x38] sm:$0xff]
        %v745 = vld [vmem:[%s171 + $0x40] sm:$0xff]
        %v746 = vld [vmem:[%s171 + $0x48] sm:$0xff]
        %v747 = vld [vmem:[%s171 + $0x50] sm:$0xff]
        %v748 = vld [vmem:[%s171 + $0x58] sm:$0xff]
        %v749 = vld [vmem:[%s171 + $0x60] sm:$0xff]
        %v750 = vld [vmem:[%s171 + $0x68] sm:$0xff]
        %v751 = vld [vmem:[%s171 + $0x70] sm:$0xff]
        %v752 = vld [vmem:[%s171 + $0x78] sm:$0xff]
        %v753 = vld [vmem:[%s171 + $0x80] sm:$0xff]
        %v754 = vld [vmem:[%s171 + $0x88] sm:$0xff]
        %v755 = vld [vmem:[%s171 + $0x90] sm:$0xff]
        %v756 = vld [vmem:[%s171 + $0x98] sm:$0xff]
        %v757 = vld [vmem:[%s171 + $0xa0] sm:$0xff]
        %v758 = vld [vmem:[%s171 + $0xa8] sm:$0xff]
        %v759 = vld [vmem:[%s171 + $0xb0] sm:$0xff]
        %v760 = vld [vmem:[%s171 + $0xb8] sm:$0xff]
        %v761 = vld [vmem:[%s171 + $0xc0] sm:$0xff]
        %v762 = vld [vmem:[%s171 + $0xc8] sm:$0xff]
        %v763 = vld [vmem:[%s171 + $0xd0] sm:$0xff]
        %v764 = vld [vmem:[%s171 + $0xd8] sm:$0xff]
        %v765 = vld [vmem:[%s171 + $0xe0] sm:$0xff]
        %v766 = vld [vmem:[%s171 + $0xe8] sm:$0xff]
        %v767 = vld [vmem:[%s171 + $0xf0] sm:$0xff]
        %v768 = vld [vmem:[%s171 + $0xf8] sm:$0xff]
        %v769 = vadd.f32 %v737, %v705
        %v770 = vadd.f32 %v738, %v706
        %v771 = vadd.f32 %v739, %v707
        %v772 = vadd.f32 %v740, %v708
        %v773 = vadd.f32 %v741, %v709
        %v774 = vadd.f32 %v742, %v710
        %v775 = vadd.f32 %v743, %v711
        %v776 = vadd.f32 %v744, %v712
        %v777 = vadd.f32 %v745, %v713
        %v778 = vadd.f32 %v746, %v714
        %v779 = vadd.f32 %v747, %v715
        %v780 = vadd.f32 %v748, %v716
        %v781 = vadd.f32 %v749, %v717
        %v782 = vadd.f32 %v750, %v718
        %v783 = vadd.f32 %v751, %v719
        %v784 = vadd.f32 %v752, %v720
        %v785 = vadd.f32 %v753, %v721
        %v786 = vadd.f32 %v754, %v722
        %v787 = vadd.f32 %v755, %v723
        %v788 = vadd.f32 %v756, %v724
        %v789 = vadd.f32 %v757, %v725
        %v790 = vadd.f32 %v758, %v726
        %v791 = vadd.f32 %v759, %v727
        %v792 = vadd.f32 %v760, %v728
        %v793 = vadd.f32 %v761, %v729
        %v794 = vadd.f32 %v762, %v730
        %v795 = vadd.f32 %v763, %v731
        %v796 = vadd.f32 %v764, %v732
        %v797 = vadd.f32 %v765, %v733
        %v798 = vadd.f32 %v766, %v734
        %v799 = vadd.f32 %v767, %v735
        %v800 = vadd.f32 %v768, %v736
        %801 = vst [vmem:[%s171] sm:$0xff] %v769
        %802 = vst [vmem:[%s171 + $0x8] sm:$0xff] %v770
        %803 = vst [vmem:[%s171 + $0x10] sm:$0xff] %v771
        %804 = vst [vmem:[%s171 + $0x18] sm:$0xff] %v772
        %805 = vst [vmem:[%s171 + $0x20] sm:$0xff] %v773
        %806 = vst [vmem:[%s171 + $0x28] sm:$0xff] %v774
        %807 = vst [vmem:[%s171 + $0x30] sm:$0xff] %v775
        %808 = vst [vmem:[%s171 + $0x38] sm:$0xff] %v776
        %809 = vst [vmem:[%s171 + $0x40] sm:$0xff] %v777
        %810 = vst [vmem:[%s171 + $0x48] sm:$0xff] %v778
        %811 = vst [vmem:[%s171 + $0x50] sm:$0xff] %v779
        %812 = vst [vmem:[%s171 + $0x58] sm:$0xff] %v780
        %813 = vst [vmem:[%s171 + $0x60] sm:$0xff] %v781
        %814 = vst [vmem:[%s171 + $0x68] sm:$0xff] %v782
        %815 = vst [vmem:[%s171 + $0x70] sm:$0xff] %v783
        %816 = vst [vmem:[%s171 + $0x78] sm:$0xff] %v784
        %817 = vst [vmem:[%s171 + $0x80] sm:$0xff] %v785
        %818 = vst [vmem:[%s171 + $0x88] sm:$0xff] %v786
        %819 = vst [vmem:[%s171 + $0x90] sm:$0xff] %v787
        %820 = vst [vmem:[%s171 + $0x98] sm:$0xff] %v788
        %821 = vst [vmem:[%s171 + $0xa0] sm:$0xff] %v789
        %822 = vst [vmem:[%s171 + $0xa8] sm:$0xff] %v790
        %823 = vst [vmem:[%s171 + $0xb0] sm:$0xff] %v791
        %824 = vst [vmem:[%s171 + $0xb8] sm:$0xff] %v792
        %825 = vst [vmem:[%s171 + $0xc0] sm:$0xff] %v793
        %826 = vst [vmem:[%s171 + $0xc8] sm:$0xff] %v794
        %827 = vst [vmem:[%s171 + $0xd0] sm:$0xff] %v795
        %828 = vst [vmem:[%s171 + $0xd8] sm:$0xff] %v796
        %829 = vst [vmem:[%s171 + $0xe0] sm:$0xff] %v797
        %830 = vst [vmem:[%s171 + $0xe8] sm:$0xff] %v798
        %831 = vst [vmem:[%s171 + $0xf0] sm:$0xff] %v799
        %832 = vst [vmem:[%s171 + $0xf8] sm:$0xff] %v800
        %s833 = sand.u32 %s100, 1
        %s834 = scalar_lea.sflag [#allocation5], %s833
        %s835 = sand.u32 %s100, 1
        %s836 = smul.addr %s835, 256
        %s837 = scalar_lea.vmem [#allocation4], %s836
        // Predicated region
        $region40: #{next_utterance_embeds.1} parent=31 // pred_check
          %p838 = pneg %p110
        $region41: #{next_utterance_embeds.1} parent=31 // pred_check_branch
          %840 = sbr.rel (%p838) target = $region43
        $region42: #{next_utterance_embeds.1} parent=31 // pred_region
          %s841 = smul.u32 32, %s24
          %s843 = ssub.s32 4096, 4096
          %844 = vsyncadd %s834, %s843
          %s845 = smul.addr %s841, 128
          %s846 = scalar_lea.hbm %s4, %s845
          %s847 = sshll.u32 %s837, 4
          %s848 = int_to_ptr.vmem [resolvable:$true] %s847
          %853 = dma.vmem_to_hbm [thread:$0]  %s848, 4096, %s846, %s834, 128, 128, 8
        $region43: #{next_utterance_embeds.1} parent=31 // pred_fallthru
          _
      $region32: #{next_utterance_embeds.1} parent=5 // pred_fallthru
        _
      %p854 = scmp.le.s32.totalorder 2, %s19
      // Predicated region
      $region44: #{next_utterance_embeds.1} parent=5 // pred_check
        %p855 = pneg %p854
      $region45: #{next_utterance_embeds.1} parent=5 // pred_check_branch
        %857 = sbr.rel (%p855) target = $region47
      $region46: #{next_utterance_embeds.1} parent=5 // pred_region
        %s858 = ssub.s32 %s19, 2
        // Predicated region
        $region48: #{next_utterance_embeds.1} parent=46 // pred_check
          %p859 = pneg %p116
        $region49: #{next_utterance_embeds.1} parent=46 // pred_check_branch
          %861 = sbr.rel (%p859) target = $region51
        $region50: #{next_utterance_embeds.1} parent=46 // pred_region
          %s862 = sand.u32 %s101, 1
          %s863 = scalar_lea.sflag [#allocation5], %s862
          %s864 = sand.u32 %s101, 1
          %s865 = smul.addr %s864, 256
          %s866 = scalar_lea.vmem [#allocation4], %s865
          %867 = dma.done %s863, 4096
        $region51: #{next_utterance_embeds.1} parent=46 // pred_fallthru
          _
      $region47: #{next_utterance_embeds.1} parent=5 // pred_fallthru
        _
    $region6: #{next_utterance_embeds.1} parent=1 // loop_footer
      %s23 = sadd.s32 1, %s19
    $region7: #{next_utterance_embeds.1} parent=1 // loop_footer_branch
      %18 = sbr.rel target = $region3
    $region8: #{next_utterance_embeds.1} parent=1 // loop_exit
      _
    %868 = vsyncpa [#allocation5], 1
    %s869 = scalar_lea.sflag [#allocation5], 1
    %870 = vsyncpa %s869, 1

</llo_original>
